<compile_context>
chip_gen: v6e
topology: v6e:2x2x1
jax: 0.10.0
libtpu: 0.0.40
codegen_flags: <defaults>
</compile_context>

<pallas_src>
import functools
import math

import jax
import jax.numpy as jnp
from jax.experimental import pallas as pl
from jax.experimental.pallas import tpu as pltpu

_HALF_LOG_2PI = 0.5 * math.log(2.0 * math.pi)


# --------------------------------------------------------------------------
# kernel
# --------------------------------------------------------------------------
def _cvae_kernel(dims, w1offs, w2offs, boffs,
                 x_ref, c_ref, eps_ref, w1_ref, w2_ref, b_ref, out_ref):
    N, G, L, y_dim = dims
    NN = N * N
    f32 = jnp.float32
    bf16 = jnp.bfloat16

    def W1(name):                      # static view into the 128-lane slab
        r0, r, cc = w1offs[name]
        return w1_ref[r0:r0 + r, 0:cc]

    def W2(name):                      # static view into the 256-lane slab
        r0, r, cc = w2offs[name]
        return w2_ref[r0:r0 + r, 0:cc]

    def Bv(name):                      # (1, w) f32 bias row
        i, w = boffs[name]
        return b_ref[i:i + 1, 0:w]

    def dot(a, w):
        return jnp.dot(a, w, preferred_element_type=f32)

    x = x_ref[...]                     # (B, N*N) f32
    c = c_ref[...]                     # (B, G)   f32
    eps = eps_ref[...]                 # (B, L)   f32
    B = x.shape[0]
    x_b = x.astype(bf16)
    c_b = c.astype(bf16)

    # ---------------- encoder (first layer split into x / c blocks) --------
    h = jnp.maximum(dot(x_b, W1('e1wx')) + dot(c_b, W1('e1wc')) + Bv('e1b'), 0.0)
    # TODO(synk): nn.Dropout is applied as eval-mode identity (no RNG mask).
    h = jnp.maximum(dot(h.astype(bf16), W1('e2w')) + Bv('e2b'), 0.0)
    h_b = h.astype(bf16)
    mu = dot(h_b, W1('muw')) + Bv('mub')
    logvar = dot(h_b, W1('lvw')) + Bv('lvb')

    # ---------------- reparameterize + Normal(mu, sd).log_prob(z) ----------
    sd = jnp.exp(0.5 * logvar)
    z = mu + eps * sd
    # (z - mu)^2 / (2 var) == eps^2 / 2
    logq = -0.5 * eps * eps - 0.5 * logvar - _HALF_LOG_2PI

    # ---------------- decode (all n_dec layers fused, no zc concat) --------
    z_b = z.astype(bf16)
    d_all = jax.nn.sigmoid(
        dot(z_b, W1('decwz')) + dot(c_b, W1('decwc')) + Bv('decb'))   # (B, n_dec*N)
    g_all = jax.nn.sigmoid(
        dot(d_all.astype(bf16), W1('gcw')) + Bv('gcb'))               # (B, n_dec*N)

    # lane i*NN + p*N + q of (left * right) equals g_i[p] * g_i[q]; the
    # per-layer W[i] scale, block sum and fc matmul are folded into Sfcw,
    # and (self.b @ fc.W^T + fc.b) is folded into the 'fcb' bias row.
    g_b = g_all.astype(bf16)
    left = dot(g_b, W2('A'))                                           # (B, n_dec*NN)
    right = dot(g_b, W2('Bm'))                                         # (B, n_dec*NN)
    xpre = dot((left * right).astype(bf16), W1('Sfcw')) + Bv('fcb')
    x_out = jnp.exp(xpre)                                              # (B, NN)

    # ---------------- predict (no zc concat) --------------------------------
    y_out = dot(z_b, W1('regwz')) + dot(c_b, W1('regwc')) + Bv('regb')

    # ---------------- lane-dense output slab: static slice stores ----------
    out_ref[:, 0:NN] = x_out
    out_ref[:, NN:NN + L] = z
    out_ref[:, NN + L:NN + 2 * L] = logq
    out_ref[:, NN + 2 * L:NN + 2 * L + y_dim] = y_out
    used = NN + 2 * L + y_dim
    pad = out_ref.shape[1] - used
    if pad > 0:
        out_ref[:, used:] = jnp.zeros((B, pad), f32)


# --------------------------------------------------------------------------
# one-time parameter packing (hoisted out of the per-call path)
# --------------------------------------------------------------------------
def _pack_weight_slab(blocks, width, dtype, row_align):
    """Row-stack blocks into one (rows, width) slab; block starts row-aligned."""
    offs, parts, cur = {}, [], 0
    for name, m in blocks:
        m = jnp.asarray(m, jnp.float32)
        r, c = m.shape
        assert c <= width, (name, c, width)
        rp = r + ((-r) % row_align)
        parts.append(jnp.zeros((rp, width), jnp.float32).at[:r, :c].set(m))
        offs[name] = (cur, r, c)
        cur += rp
    return jnp.concatenate(parts, axis=0).astype(dtype), offs


def _pack_bias_slab(biases, width=128):
    offs, rows = {}, []
    for i, (name, v) in enumerate(biases):
        v = jnp.asarray(v, jnp.float32).reshape(-1)
        assert v.shape[0] <= width
        rows.append(jnp.zeros((width,), jnp.float32).at[:v.shape[0]].set(v))
        offs[name] = (i, int(v.shape[0]))
    return jnp.stack(rows, axis=0), offs


def prepare_params(p, dims):
    """Pack CVAE_MUTI parameters (torch layout) into three slabs. Call once."""
    N, G, L, H1, H2, n_dec, y_dim = dims
    NN = N * N
    assert L == N, ("self.b has latent_dim**2 entries but is broadcast to "
                    "n_nodes**2: latent_dim must equal n_nodes")
    f32 = jnp.float32

    eyeN = jnp.eye(N, dtype=f32)
    # R_bcast[p, p*N + q] = 1   ;   R_tile[q, p*N + q] = 1   (pure 0/1, bf16-exact)
    R_bcast = jnp.kron(eyeN, jnp.ones((1, N), f32))               # (N, NN)
    R_tile = jnp.kron(jnp.ones((1, N), f32), eyeN)                # (N, NN)
    Wp = jnp.asarray(p['W'], f32).reshape(n_dec)

    fcw_t = jnp.asarray(p['fcw'], f32).T                          # (NN, NN)
    A = jax.scipy.linalg.block_diag(*([R_bcast] * n_dec))         # (n_dec*N, n_dec*NN)
    Bm = jax.scipy.linalg.block_diag(*([R_tile] * n_dec))
    # Fold W[i] into the stacked fc weight so A/Bm stay 0/1.
    Sfcw = jnp.concatenate([Wp[i] * fcw_t for i in range(n_dec)], axis=0)

    e1w_t = jnp.asarray(p['e1w'], f32).T                          # (NN+G, H2)
    regw_t = jnp.asarray(p['regw'], f32).T                        # (L+G, y_dim)
    decw_all = jnp.concatenate([jnp.asarray(p['decw'][i], f32).T
                                for i in range(n_dec)], axis=1)   # (L+G, n_dec*N)
    gcw_blk = jax.scipy.linalg.block_diag(
        *[jnp.asarray(p['gcw'][i], f32).T for i in range(n_dec)])  # (n_dec*N, n_dec*N)

    # fold self.b into fc bias:  fc(flat + b) = flat @ fcW^T + (b @ fcW^T + fcb)
    fcb_folded = jnp.asarray(p['b'], f32) @ fcw_t + jnp.asarray(p['fcb'], f32)

    # 128-lane slab (everything except A/Bm), bf16, 16-row aligned blocks.
    w1blocks = [
        ('e1wx', e1w_t[:NN]), ('e1wc', e1w_t[NN:]),
        ('e2w', jnp.asarray(p['e2w'], f32).T),
        ('muw', jnp.asarray(p['muw'], f32).T), ('lvw', jnp.asarray(p['lvw'], f32).T),
        ('decwz', decw_all[:L]), ('decwc', decw_all[L:]),
        ('gcw', gcw_blk), ('Sfcw', Sfcw),
        ('regwz', regw_t[:L]), ('regwc', regw_t[L:]),
    ]
    wslab1, w1offs = _pack_weight_slab(w1blocks, 128, jnp.bfloat16, row_align=16)

    # 256-lane slab only for the wide 0/1 outer-product matrices.
    w2width = ((n_dec * NN + 127) // 128) * 128
    wslab2, w2offs = _pack_weight_slab([('A', A), ('Bm', Bm)],
                                       w2width, jnp.bfloat16, row_align=16)

    bslab, boffs = _pack_bias_slab([
        ('e1b', p['e1b']), ('e2b', p['e2b']),
        ('mub', p['mub']), ('lvb', p['lvb']),
        ('decb', jnp.asarray(p['decb'], f32).reshape(-1)),
        ('gcb', jnp.asarray(p['gcb'], f32).reshape(-1)),
        ('fcb', fcb_folded), ('regb', p['regb']),
    ])

    return {'wslab1': wslab1, 'wslab2': wslab2, 'bslab': bslab,
            'w1offs': w1offs, 'w2offs': w2offs, 'boffs': boffs,
            'dims': (N, G, L, y_dim)}


# --------------------------------------------------------------------------
# forward wrapper: one pallas_call + output split (no wrapper concat)
# --------------------------------------------------------------------------
def cvae_muti_forward(x_input, c_input, eps, prep):
    N, G, L, y_dim = prep['dims']
    NN = N * N
    B = x_input.shape[0]

    x_flat = x_input.reshape(B, NN).astype(jnp.float32)
    c = c_input.astype(jnp.float32)
    eps = eps.astype(jnp.float32)

    used = NN + 2 * L + y_dim
    out_w = ((used + 127) // 128) * 128

    kernel = functools.partial(_cvae_kernel, prep['dims'],
                               prep['w1offs'], prep['w2offs'], prep['boffs'])
    out_shape = jax.ShapeDtypeStruct((B, out_w), jnp.float32)
    operands = (x_flat, c, eps, prep['wslab1'], prep['wslab2'], prep['bslab'])

    if B % 8 == 0:
        # Batched path: 1-D batch grid, slabs VMEM-resident across steps,
        # "parallel" so v7x's two TensorCores split the rows.
        rb = next(r for r in (256, 128, 64, 32, 16, 8) if B % r == 0)
        row = lambda w: pl.BlockSpec((rb, w), lambda i: (i, 0))
        full = lambda a: pl.BlockSpec(a.shape, lambda i: (0, 0))
        packed = pl.pallas_call(
            kernel,
            out_shape=out_shape,
            grid=(B // rb,),
            in_specs=[row(NN), row(G), row(L),
                      full(prep['wslab1']), full(prep['wslab2']), full(prep['bslab'])],
            out_specs=row(out_w),
            compiler_params=pltpu.CompilerParams(
                dimension_semantics=("parallel",)),
        )(*operands)
    else:
        # Gridless whole-array call for tiny batches (demo: B = 2).
        vmem = pl.BlockSpec(memory_space=pltpu.MemorySpace.VMEM)
        packed = pl.pallas_call(
            kernel,
            out_shape=out_shape,
            in_specs=[vmem] * 6,
            out_specs=vmem,
        )(*operands)

    x_out = packed[:, :NN]
    z = packed[:, NN:NN + L]
    logq = packed[:, NN + L:NN + 2 * L]
    y_out = packed[:, NN + 2 * L:used]
    return x_out, y_out, z, logq


# --------------------------------------------------------------------------
# synthetic params (torch Linear layout: (out, in)) + pure-JAX reference
# --------------------------------------------------------------------------
def init_params(key, N, G, L, H1, H2, n_dec, y_dim):
    keys = jax.random.split(key, 10)
    s = 0.1

    def lin(k, fin, fout):
        kw, kb = jax.random.split(k)
        return (s * jax.random.normal(kw, (fout, fin), jnp.float32),
                s * jax.random.normal(kb, (fout,), jnp.float32))

    e1w, e1b = lin(keys[0], N * N + G, H2)
    e2w, e2b = lin(keys[1], H2, H1)
    muw, mub = lin(keys[2], H1, L)
    lvw, lvb = lin(keys[3], H1, L)

    dw, db = [], []
    for k in jax.random.split(keys[4], n_dec):
        w, b = lin(k, L + G, N)
        dw.append(w); db.append(b)
    gw, gb = [], []
    for k in jax.random.split(keys[5], n_dec):
        w, b = lin(k, N, N)
        gw.append(w); gb.append(b)

    fcw, fcb = lin(keys[6], N * N, N * N)
    regw, regb = lin(keys[7], L + G, y_dim)
    Wp = s * jax.random.normal(keys[8], (n_dec, 1), jnp.float32)
    bp = s * jax.random.normal(keys[9], (L * L,), jnp.float32)   # requires L == N

    return {
        'e1w': e1w, 'e1b': e1b, 'e2w': e2w, 'e2b': e2b,
        'muw': muw, 'mub': mub, 'lvw': lvw, 'lvb': lvb,
        'decw': jnp.stack(dw), 'decb': jnp.stack(db),
        'gcw': jnp.stack(gw), 'gcb': jnp.stack(gb),
        'fcw': fcw, 'fcb': fcb, 'regw': regw, 'regb': regb,
        'W': Wp, 'b': bp,
    }


def _reference(x, c, eps, p, dims):
    """Pure-JAX (f32) replica of CVAE_MUTI.forward (eval mode)."""
    N, G, L, H1, H2, n_dec, y_dim = dims
    B = x.shape[0]
    xc = jnp.concatenate([x.reshape(B, N * N), c], -1)
    h = jax.nn.relu(xc @ p['e1w'].T + p['e1b'])
    h = jax.nn.relu(h @ p['e2w'].T + p['e2b'])
    mu = h @ p['muw'].T + p['mub']
    logvar = h @ p['lvw'].T + p['lvb']
    sd = jnp.exp(0.5 * logvar)
    z = mu + eps * sd
    logq = -((z - mu) ** 2) / (2 * sd * sd) - 0.5 * logvar - 0.5 * jnp.log(2 * jnp.pi)
    zc = jnp.concatenate([z, c], -1)
    flat = jnp.zeros((B, N * N), jnp.float32)
    for i in range(n_dec):
        d = jax.nn.sigmoid(zc @ p['decw'][i].T + p['decb'][i])
        g = jax.nn.sigmoid(d @ p['gcw'][i].T + p['gcb'][i])
        outer = (g[:, :, None] * g[:, None, :]).reshape(B, N * N)
        flat = flat + p['W'][i, 0] * outer
    flat = flat + p['b'][None, :]
    x_out = jnp.exp(flat @ p['fcw'].T + p['fcb'])
    y_out = zc @ p['regw'].T + p['regb']
    return x_out, y_out, z, logq


if __name__ == "__main__":
    # config: n_nodes=8, latent_dim=8 (must equal n_nodes so self.b expands to
    # n_nodes**2), group_dim=4, hidden1_dim=32, hidden2_dim=64, n_dec_layers=3,
    # y_dim=2, batch=2
    N, G, L, H1, H2, n_dec, y_dim, B = 8, 4, 8, 32, 64, 3, 2, 2
    dims = (N, G, L, H1, H2, n_dec, y_dim)

    key = jax.random.PRNGKey(0)
    kp, kx, kc, ke = jax.random.split(key, 4)
    params = init_params(kp, N, G, L, H1, H2, n_dec, y_dim)
    prep = prepare_params(params, dims)          # one-time packing

    x = jax.random.normal(kx, (B, N, N), jnp.float32)     # x_input
    c = jax.random.normal(kc, (B, G), jnp.float32)        # c_input
    eps = jax.random.normal(ke, (B, L), jnp.float32)      # torch.randn_like(sd)

    x_out, y_out, z, log_q = cvae_muti_forward(x, c, eps, prep)
    jax.block_until_ready((x_out, y_out, z, log_q))

    assert x_out.shape == (B, N * N)
    assert y_out.shape == (B, y_dim)
    assert z.shape == (B, L)
    assert log_q.shape == (B, L)

    # sanity check against a pure-JAX f32 reference (tolerance covers bf16
    # weight quantization + MXU accumulation differences)
    rx, ry, rz, rq = _reference(x, c, eps, params, dims)
    for a, b_ in ((x_out, rx), (y_out, ry), (z, rz), (log_q, rq)):
        assert jnp.allclose(a, b_, atol=2e-2, rtol=2e-2), float(jnp.max(jnp.abs(a - b_)))

    print("KERNEL_OK")
</pallas_src>

<mosaic_0001>
module attributes {stable_mosaic.version = 11 : i64} {
  func.func @_cvae_kernel(%arg0: memref<2x64xf32, #tpu.memory_space<vmem>>, %arg1: memref<2x4xf32, #tpu.memory_space<vmem>>, %arg2: memref<2x8xf32, #tpu.memory_space<vmem>>, %arg3: memref<496x128xbf16, #tpu.memory_space<vmem>>, %arg4: memref<64x256xbf16, #tpu.memory_space<vmem>>, %arg5: memref<8x128xf32, #tpu.memory_space<vmem>>, %arg6: memref<2x128xf32, #tpu.memory_space<vmem>>) attributes {dimension_semantics = [], scalar_prefetch = 0 : i64, scratch_operands = 0 : i64, tpu.core_type = #tpu.core_type<tc>} {
    %c0 = arith.constant 0 : index
    %c0_0 = arith.constant 0 : index
    %0 = vector.load %arg0[%c0, %c0_0] : memref<2x64xf32, #tpu.memory_space<vmem>>, vector<2x64xf32>
    %c0_1 = arith.constant 0 : index
    %c0_2 = arith.constant 0 : index
    %1 = vector.load %arg1[%c0_1, %c0_2] : memref<2x4xf32, #tpu.memory_space<vmem>>, vector<2x4xf32>
    %c0_3 = arith.constant 0 : index
    %c0_4 = arith.constant 0 : index
    %2 = vector.load %arg2[%c0_3, %c0_4] : memref<2x8xf32, #tpu.memory_space<vmem>>, vector<2x8xf32>
    %3 = arith.truncf %0 : vector<2x64xf32> to vector<2x64xbf16>
    %4 = arith.truncf %1 : vector<2x4xf32> to vector<2x4xbf16>
    %c0_5 = arith.constant 0 : index
    %c0_6 = arith.constant 0 : index
    %5 = vector.load %arg3[%c0_5, %c0_6] : memref<496x128xbf16, #tpu.memory_space<vmem>>, vector<64x64xbf16>
    %cst = arith.constant dense<0.000000e+00> : vector<2x64xf32>
    %6 = tpu.matmul %3, %5, %cst {dimension_numbers = #tpu.dot_dimension_numbers<[1], [0], [0], [1], [0, 0, 1, 1], [], []>} : vector<2x64xbf16>, vector<64x64xbf16>, vector<2x64xf32> -> vector<2x64xf32>
    %c64 = arith.constant 64 : index
    %c0_7 = arith.constant 0 : index
    %7 = vector.load %arg3[%c64, %c0_7] : memref<496x128xbf16, #tpu.memory_space<vmem>>, vector<4x64xbf16>
    %cst_8 = arith.constant dense<0.000000e+00> : vector<2x64xf32>
    %8 = tpu.matmul %4, %7, %cst_8 {dimension_numbers = #tpu.dot_dimension_numbers<[1], [0], [0], [1], [0, 0, 1, 1], [], []>} : vector<2x4xbf16>, vector<4x64xbf16>, vector<2x64xf32> -> vector<2x64xf32>
    %9 = arith.addf %6, %8 : vector<2x64xf32>
    %c0_9 = arith.constant 0 : index
    %c0_10 = arith.constant 0 : index
    %10 = vector.load %arg5[%c0_9, %c0_10] : memref<8x128xf32, #tpu.memory_space<vmem>>, vector<1x64xf32>
    %11 = vector.broadcast %10 : vector<1x64xf32> to vector<2x64xf32>
    %12 = arith.addf %9, %11 : vector<2x64xf32>
    %cst_11 = arith.constant 0.000000e+00 : f32
    %13 = vector.broadcast %cst_11 : f32 to vector<2x64xf32>
    %14 = arith.maximumf %12, %13 : vector<2x64xf32>
    %15 = arith.truncf %14 : vector<2x64xf32> to vector<2x64xbf16>
    %c80 = arith.constant 80 : index
    %c0_12 = arith.constant 0 : index
    %16 = vector.load %arg3[%c80, %c0_12] : memref<496x128xbf16, #tpu.memory_space<vmem>>, vector<64x32xbf16>
    %cst_13 = arith.constant dense<0.000000e+00> : vector<2x32xf32>
    %17 = tpu.matmul %15, %16, %cst_13 {dimension_numbers = #tpu.dot_dimension_numbers<[1], [0], [0], [1], [0, 0, 1, 1], [], []>} : vector<2x64xbf16>, vector<64x32xbf16>, vector<2x32xf32> -> vector<2x32xf32>
    %c1 = arith.constant 1 : index
    %c0_14 = arith.constant 0 : index
    %18 = vector.load %arg5[%c1, %c0_14] : memref<8x128xf32, #tpu.memory_space<vmem>>, vector<1x32xf32>
    %19 = vector.broadcast %18 : vector<1x32xf32> to vector<2x32xf32>
    %20 = arith.addf %17, %19 : vector<2x32xf32>
    %cst_15 = arith.constant 0.000000e+00 : f32
    %21 = vector.broadcast %cst_15 : f32 to vector<2x32xf32>
    %22 = arith.maximumf %20, %21 : vector<2x32xf32>
    %23 = arith.truncf %22 : vector<2x32xf32> to vector<2x32xbf16>
    %c144 = arith.constant 144 : index
    %c0_16 = arith.constant 0 : index
    %24 = vector.load %arg3[%c144, %c0_16] : memref<496x128xbf16, #tpu.memory_space<vmem>>, vector<32x8xbf16>
    %cst_17 = arith.constant dense<0.000000e+00> : vector<2x8xf32>
    %25 = tpu.matmul %23, %24, %cst_17 {dimension_numbers = #tpu.dot_dimension_numbers<[1], [0], [0], [1], [0, 0, 1, 1], [], []>} : vector<2x32xbf16>, vector<32x8xbf16>, vector<2x8xf32> -> vector<2x8xf32>
    %c2 = arith.constant 2 : index
    %c0_18 = arith.constant 0 : index
    %26 = vector.load %arg5[%c2, %c0_18] : memref<8x128xf32, #tpu.memory_space<vmem>>, vector<1x8xf32>
    %27 = vector.broadcast %26 : vector<1x8xf32> to vector<2x8xf32>
    %28 = arith.addf %25, %27 : vector<2x8xf32>
    %c176 = arith.constant 176 : index
    %c0_19 = arith.constant 0 : index
    %29 = vector.load %arg3[%c176, %c0_19] : memref<496x128xbf16, #tpu.memory_space<vmem>>, vector<32x8xbf16>
    %cst_20 = arith.constant dense<0.000000e+00> : vector<2x8xf32>
    %30 = tpu.matmul %23, %29, %cst_20 {dimension_numbers = #tpu.dot_dimension_numbers<[1], [0], [0], [1], [0, 0, 1, 1], [], []>} : vector<2x32xbf16>, vector<32x8xbf16>, vector<2x8xf32> -> vector<2x8xf32>
    %c3 = arith.constant 3 : index
    %c0_21 = arith.constant 0 : index
    %31 = vector.load %arg5[%c3, %c0_21] : memref<8x128xf32, #tpu.memory_space<vmem>>, vector<1x8xf32>
    %32 = vector.broadcast %31 : vector<1x8xf32> to vector<2x8xf32>
    %33 = arith.addf %30, %32 : vector<2x8xf32>
    %cst_22 = arith.constant 5.000000e-01 : f32
    %34 = vector.broadcast %cst_22 : f32 to vector<2x8xf32>
    %35 = arith.mulf %34, %33 : vector<2x8xf32>
    %36 = math.exp %35 : vector<2x8xf32>
    %37 = arith.mulf %2, %36 : vector<2x8xf32>
    %38 = arith.addf %28, %37 : vector<2x8xf32>
    %cst_23 = arith.constant -5.000000e-01 : f32
    %39 = vector.broadcast %cst_23 : f32 to vector<2x8xf32>
    %40 = arith.mulf %39, %2 : vector<2x8xf32>
    %41 = arith.mulf %40, %2 : vector<2x8xf32>
    %cst_24 = arith.constant 5.000000e-01 : f32
    %42 = vector.broadcast %cst_24 : f32 to vector<2x8xf32>
    %43 = arith.mulf %42, %33 : vector<2x8xf32>
    %44 = arith.subf %41, %43 : vector<2x8xf32>
    %cst_25 = arith.constant 0.918938517 : f32
    %45 = vector.broadcast %cst_25 : f32 to vector<2x8xf32>
    %46 = arith.subf %44, %45 : vector<2x8xf32>
    %47 = arith.truncf %38 : vector<2x8xf32> to vector<2x8xbf16>
    %c208 = arith.constant 208 : index
    %c0_26 = arith.constant 0 : index
    %48 = vector.load %arg3[%c208, %c0_26] : memref<496x128xbf16, #tpu.memory_space<vmem>>, vector<8x24xbf16>
    %cst_27 = arith.constant dense<0.000000e+00> : vector<2x24xf32>
    %49 = tpu.matmul %47, %48, %cst_27 {dimension_numbers = #tpu.dot_dimension_numbers<[1], [0], [0], [1], [0, 0, 1, 1], [], []>} : vector<2x8xbf16>, vector<8x24xbf16>, vector<2x24xf32> -> vector<2x24xf32>
    %c224 = arith.constant 224 : index
    %c0_28 = arith.constant 0 : index
    %50 = vector.load %arg3[%c224, %c0_28] : memref<496x128xbf16, #tpu.memory_space<vmem>>, vector<4x24xbf16>
    %cst_29 = arith.constant dense<0.000000e+00> : vector<2x24xf32>
    %51 = tpu.matmul %4, %50, %cst_29 {dimension_numbers = #tpu.dot_dimension_numbers<[1], [0], [0], [1], [0, 0, 1, 1], [], []>} : vector<2x4xbf16>, vector<4x24xbf16>, vector<2x24xf32> -> vector<2x24xf32>
    %52 = arith.addf %49, %51 : vector<2x24xf32>
    %c4 = arith.constant 4 : index
    %c0_30 = arith.constant 0 : index
    %53 = vector.load %arg5[%c4, %c0_30] : memref<8x128xf32, #tpu.memory_space<vmem>>, vector<1x24xf32>
    %54 = vector.broadcast %53 : vector<1x24xf32> to vector<2x24xf32>
    %55 = arith.addf %52, %54 : vector<2x24xf32>
    %56 = arith.negf %55 : vector<2x24xf32>
    %57 = math.exp %56 : vector<2x24xf32>
    %cst_31 = arith.constant 1.000000e+00 : f32
    %58 = vector.broadcast %cst_31 : f32 to vector<2x24xf32>
    %59 = arith.addf %58, %57 : vector<2x24xf32>
    %60 = arith.divf %58, %59 : vector<2x24xf32>
    %61 = arith.truncf %60 : vector<2x24xf32> to vector<2x24xbf16>
    %c240 = arith.constant 240 : index
    %c0_32 = arith.constant 0 : index
    %62 = vector.load %arg3[%c240, %c0_32] : memref<496x128xbf16, #tpu.memory_space<vmem>>, vector<24x24xbf16>
    %cst_33 = arith.constant dense<0.000000e+00> : vector<2x24xf32>
    %63 = tpu.matmul %61, %62, %cst_33 {dimension_numbers = #tpu.dot_dimension_numbers<[1], [0], [0], [1], [0, 0, 1, 1], [], []>} : vector<2x24xbf16>, vector<24x24xbf16>, vector<2x24xf32> -> vector<2x24xf32>
    %c5 = arith.constant 5 : index
    %c0_34 = arith.constant 0 : index
    %64 = vector.load %arg5[%c5, %c0_34] : memref<8x128xf32, #tpu.memory_space<vmem>>, vector<1x24xf32>
    %65 = vector.broadcast %64 : vector<1x24xf32> to vector<2x24xf32>
    %66 = arith.addf %63, %65 : vector<2x24xf32>
    %67 = arith.negf %66 : vector<2x24xf32>
    %68 = math.exp %67 : vector<2x24xf32>
    %cst_35 = arith.constant 1.000000e+00 : f32
    %69 = vector.broadcast %cst_35 : f32 to vector<2x24xf32>
    %70 = arith.addf %69, %68 : vector<2x24xf32>
    %71 = arith.divf %69, %70 : vector<2x24xf32>
    %72 = arith.truncf %71 : vector<2x24xf32> to vector<2x24xbf16>
    %c0_36 = arith.constant 0 : index
    %c0_37 = arith.constant 0 : index
    %73 = vector.load %arg4[%c0_36, %c0_37] : memref<64x256xbf16, #tpu.memory_space<vmem>>, vector<24x192xbf16>
    %cst_38 = arith.constant dense<0.000000e+00> : vector<2x192xf32>
    %74 = tpu.matmul %72, %73, %cst_38 {dimension_numbers = #tpu.dot_dimension_numbers<[1], [0], [0], [1], [0, 0, 1, 1], [], []>} : vector<2x24xbf16>, vector<24x192xbf16>, vector<2x192xf32> -> vector<2x192xf32>
    %c32 = arith.constant 32 : index
    %c0_39 = arith.constant 0 : index
    %75 = vector.load %arg4[%c32, %c0_39] : memref<64x256xbf16, #tpu.memory_space<vmem>>, vector<24x192xbf16>
    %cst_40 = arith.constant dense<0.000000e+00> : vector<2x192xf32>
    %76 = tpu.matmul %72, %75, %cst_40 {dimension_numbers = #tpu.dot_dimension_numbers<[1], [0], [0], [1], [0, 0, 1, 1], [], []>} : vector<2x24xbf16>, vector<24x192xbf16>, vector<2x192xf32> -> vector<2x192xf32>
    %77 = arith.mulf %74, %76 : vector<2x192xf32>
    %78 = arith.truncf %77 : vector<2x192xf32> to vector<2x192xbf16>
    %c272 = arith.constant 272 : index
    %c0_41 = arith.constant 0 : index
    %79 = vector.load %arg3[%c272, %c0_41] : memref<496x128xbf16, #tpu.memory_space<vmem>>, vector<192x64xbf16>
    %cst_42 = arith.constant dense<0.000000e+00> : vector<2x64xf32>
    %80 = tpu.matmul %78, %79, %cst_42 {dimension_numbers = #tpu.dot_dimension_numbers<[1], [0], [0], [1], [0, 0, 1, 1], [], []>} : vector<2x192xbf16>, vector<192x64xbf16>, vector<2x64xf32> -> vector<2x64xf32>
    %c6 = arith.constant 6 : index
    %c0_43 = arith.constant 0 : index
    %81 = vector.load %arg5[%c6, %c0_43] : memref<8x128xf32, #tpu.memory_space<vmem>>, vector<1x64xf32>
    %82 = vector.broadcast %81 : vector<1x64xf32> to vector<2x64xf32>
    %83 = arith.addf %80, %82 : vector<2x64xf32>
    %84 = math.exp %83 : vector<2x64xf32>
    %c464 = arith.constant 464 : index
    %c0_44 = arith.constant 0 : index
    %85 = vector.load %arg3[%c464, %c0_44] : memref<496x128xbf16, #tpu.memory_space<vmem>>, vector<8x2xbf16>
    %cst_45 = arith.constant dense<0.000000e+00> : vector<2x2xf32>
    %86 = tpu.matmul %47, %85, %cst_45 {dimension_numbers = #tpu.dot_dimension_numbers<[1], [0], [0], [1], [0, 0, 1, 1], [], []>} : vector<2x8xbf16>, vector<8x2xbf16>, vector<2x2xf32> -> vector<2x2xf32>
    %c480 = arith.constant 480 : index
    %c0_46 = arith.constant 0 : index
    %87 = vector.load %arg3[%c480, %c0_46] : memref<496x128xbf16, #tpu.memory_space<vmem>>, vector<4x2xbf16>
    %cst_47 = arith.constant dense<0.000000e+00> : vector<2x2xf32>
    %88 = tpu.matmul %4, %87, %cst_47 {dimension_numbers = #tpu.dot_dimension_numbers<[1], [0], [0], [1], [0, 0, 1, 1], [], []>} : vector<2x4xbf16>, vector<4x2xbf16>, vector<2x2xf32> -> vector<2x2xf32>
    %89 = arith.addf %86, %88 : vector<2x2xf32>
    %c7 = arith.constant 7 : index
    %c0_48 = arith.constant 0 : index
    %90 = vector.load %arg5[%c7, %c0_48] : memref<8x128xf32, #tpu.memory_space<vmem>>, vector<1x2xf32>
    %91 = vector.broadcast %90 : vector<1x2xf32> to vector<2x2xf32>
    %92 = arith.addf %89, %91 : vector<2x2xf32>
    %c0_49 = arith.constant 0 : index
    %c0_50 = arith.constant 0 : index
    %93 = vector.load %arg6[%c0_49, %c0_50] : memref<2x128xf32, #tpu.memory_space<vmem>>, vector<2x64xf32>
    tpu.vector_store %arg6[%c0_49, %c0_50], %84 {strides = array<i32>} : memref<2x128xf32, #tpu.memory_space<vmem>>, vector<2x64xf32>,
    %c0_51 = arith.constant 0 : index
    %c64_52 = arith.constant 64 : index
    %94 = vector.load %arg6[%c0_51, %c64_52] : memref<2x128xf32, #tpu.memory_space<vmem>>, vector<2x8xf32>
    tpu.vector_store %arg6[%c0_51, %c64_52], %38 {strides = array<i32>} : memref<2x128xf32, #tpu.memory_space<vmem>>, vector<2x8xf32>,
    %c0_53 = arith.constant 0 : index
    %c72 = arith.constant 72 : index
    %95 = vector.load %arg6[%c0_53, %c72] : memref<2x128xf32, #tpu.memory_space<vmem>>, vector<2x8xf32>
    tpu.vector_store %arg6[%c0_53, %c72], %46 {strides = array<i32>} : memref<2x128xf32, #tpu.memory_space<vmem>>, vector<2x8xf32>,
    %c0_54 = arith.constant 0 : index
    %c80_55 = arith.constant 80 : index
    %96 = vector.load %arg6[%c0_54, %c80_55] : memref<2x128xf32, #tpu.memory_space<vmem>>, vector<2x2xf32>
    tpu.vector_store %arg6[%c0_54, %c80_55], %92 {strides = array<i32>} : memref<2x128xf32, #tpu.memory_space<vmem>>, vector<2x2xf32>,
    %cst_56 = arith.constant 0.000000e+00 : f32
    %97 = vector.broadcast %cst_56 : f32 to vector<2x46xf32>
    %c0_57 = arith.constant 0 : index
    %c82 = arith.constant 82 : index
    %98 = vector.load %arg6[%c0_57, %c82] : memref<2x128xf32, #tpu.memory_space<vmem>>, vector<2x46xf32>
    tpu.vector_store %arg6[%c0_57, %c82], %97 {strides = array<i32>} : memref<2x128xf32, #tpu.memory_space<vmem>>, vector<2x46xf32>,
    return
  }
}

</mosaic_0001>

<llo_original>
// kernel: tpu_custom_call.1
$region0: #{tpu_custom_call.1}
  #allocation0 [shape = 'u32[]', space=smem, size = 0x4, offset = 0x4, fixed_abs, tag = 'smem constant byte address 0x4 - core index']
  #allocation1 [shape = 'u32[144,128]{1,0:T(1,128)}', space=vmem, size = 0x12000, scoped, tag = 'internal scratch']
  %s0 = inlined_call_operand.hbm [shape: f32[2,64], index: 0, kind: input, shape index: {}]
  %s1 = inlined_call_operand.hbm [shape: f32[2,4], index: 1, kind: input, shape index: {}]
  %s2 = inlined_call_operand.hbm [shape: f32[2,8], index: 2, kind: input, shape index: {}]
  %s3 = inlined_call_operand.hbm [shape: bf16[496,128], index: 3, kind: input, shape index: {}]
  %s4 = inlined_call_operand.hbm [shape: bf16[64,256], index: 4, kind: input, shape index: {}]
  %s5 = inlined_call_operand.vmem [shape: f32[8,128], index: 5, kind: input, shape index: {}]
  %s6 = inlined_call_operand.hbm [shape: f32[2,128], index: 6, kind: output, shape index: {}]
  %s7 = sld [smem:[#allocation0]]
  $region54: #{tpu_custom_call.1} parent=0
    _
  %s9 = ssub.s32 1, %s7
  %s10 = scalar_select 0, %s9, %s7
  $region1: #{tpu_custom_call.1} parent=0
    #allocation2 [shape = 'u8[1024]{0}', space=vmem, size = 0x400, scoped, tag = 'input window, operand 0, single buffered']
    #allocation3 [shape = 's32[1]{0}', space=sflag, size = 0x4, scoped, tag = 'scoped memory for tpu_custom_call.1']
    #allocation4 [shape = 's32[1]{0}', space=sflag, size = 0x4, scoped, tag = 'scoped memory for tpu_custom_call.1']
    #allocation5 [shape = 'u8[1024]{0}', space=vmem, size = 0x400, scoped, tag = 'input window, operand 1, single buffered']
    #allocation6 [shape = 's32[1]{0}', space=sflag, size = 0x4, scoped, tag = 'scoped memory for tpu_custom_call.1']
    #allocation7 [shape = 'u8[1024]{0}', space=vmem, size = 0x400, scoped, tag = 'input window, operand 2, single buffered']
    #allocation8 [shape = 'u8[126976]{0}', space=vmem, size = 0x1f000, scoped, tag = 'input window, operand 3, single buffered']
    #allocation9 [shape = 's32[1]{0}', space=sflag, size = 0x4, scoped, tag = 'scoped memory for tpu_custom_call.1']
    #allocation10 [shape = 'u8[32768]{0}', space=vmem, size = 0x8000, scoped, tag = 'input window, operand 4, single buffered']
    #allocation11 [shape = 'u8[1024]{0}', space=vmem, size = 0x400, scoped, tag = 'output window, operand 0, single buffered']
    %11 = vsyncpa [#allocation3], 0
    %12 = vsyncpa [#allocation6], 0
    %13 = vsyncpa [#allocation9], 0
    %14 = vsyncpa [#allocation4], 0
    // Predicated region
    $region2: #{tpu_custom_call.1} parent=1 // pred_check
      _
    $region3: #{tpu_custom_call.1} parent=1 // pred_check_branch
      %16 = sbr.rel (0) target = $region5
    $region4: #{tpu_custom_call.1} parent=1 // pred_region
      %s18 = ssub.s32 32, 32
      %19 = vsyncadd [#allocation3], %s18
      %s21 = sshll.u32 [#allocation2], 4
      %s22 = int_to_ptr.vmem [resolvable:$true] %s21
      %24 = dma.hbm_to_vmem [thread:$0]  %s0, 32, %s22, [#allocation3]
    $region5: #{tpu_custom_call.1} parent=1 // pred_fallthru
      _
    // Predicated region
    $region6: #{tpu_custom_call.1} parent=1 // pred_check
      _
    $region7: #{tpu_custom_call.1} parent=1 // pred_check_branch
      %26 = sbr.rel (0) target = $region9
    $region8: #{tpu_custom_call.1} parent=1 // pred_region
      %s28 = ssub.s32 32, 32
      %29 = vsyncadd [#allocation6], %s28
      %s31 = sshll.u32 [#allocation5], 4
      %s32 = int_to_ptr.vmem [resolvable:$true] %s31
      %34 = dma.hbm_to_vmem [thread:$0]  %s1, 32, %s32, [#allocation6]
    $region9: #{tpu_custom_call.1} parent=1 // pred_fallthru
      _
    // Predicated region
    $region10: #{tpu_custom_call.1} parent=1 // pred_check
      _
    $region11: #{tpu_custom_call.1} parent=1 // pred_check_branch
      %36 = sbr.rel (0) target = $region13
    $region12: #{tpu_custom_call.1} parent=1 // pred_region
      %s38 = ssub.s32 32, 32
      %39 = vsyncadd [#allocation6], %s38
      %s41 = sshll.u32 [#allocation7], 4
      %s42 = int_to_ptr.vmem [resolvable:$true] %s41
      %44 = dma.hbm_to_vmem [thread:$0]  %s2, 32, %s42, [#allocation6]
    $region13: #{tpu_custom_call.1} parent=1 // pred_fallthru
      _
    // Predicated region
    $region14: #{tpu_custom_call.1} parent=1 // pred_check
      _
    $region15: #{tpu_custom_call.1} parent=1 // pred_check_branch
      %46 = sbr.rel (0) target = $region17
    $region16: #{tpu_custom_call.1} parent=1 // pred_region
      %s48 = ssub.s32 3968, 3968
      %49 = vsyncadd [#allocation9], %s48
      %s50 = sshll.u32 [#allocation8], 4
      %s51 = int_to_ptr.vmem [resolvable:$true] %s50
      %56 = dma.hbm_to_vmem [thread:$0]  %s3, 3968, %s51, [#allocation9], 64, 64, 4
    $region17: #{tpu_custom_call.1} parent=1 // pred_fallthru
      _
    // Predicated region
    $region18: #{tpu_custom_call.1} parent=1 // pred_check
      _
    $region19: #{tpu_custom_call.1} parent=1 // pred_check_branch
      %58 = sbr.rel (0) target = $region21
    $region20: #{tpu_custom_call.1} parent=1 // pred_region
      %s60 = ssub.s32 1024, 1024
      %61 = vsyncadd [#allocation9], %s60
      %s62 = sshll.u32 [#allocation10], 4
      %s63 = int_to_ptr.vmem [resolvable:$true] %s62
      %68 = dma.hbm_to_vmem [thread:$0]  %s4, 1024, %s63, [#allocation9], 128, 128, 8
    $region21: #{tpu_custom_call.1} parent=1 // pred_fallthru
      _
    // Predicated region
    $region22: #{tpu_custom_call.1} parent=1 // pred_check
      _
    $region23: #{tpu_custom_call.1} parent=1 // pred_check_branch
      %70 = sbr.rel (0) target = $region25
    $region24: #{tpu_custom_call.1} parent=1 // pred_region
      _
    $region25: #{tpu_custom_call.1} parent=1 // pred_fallthru
      _
    // Predicated region
    $region26: #{tpu_custom_call.1} parent=1 // pred_check
      _
    $region27: #{tpu_custom_call.1} parent=1 // pred_check_branch
      %72 = sbr.rel (0) target = $region29
    $region28: #{tpu_custom_call.1} parent=1 // pred_region
      %73 = dma.done [#allocation3], 32
    $region29: #{tpu_custom_call.1} parent=1 // pred_fallthru
      _
    // Predicated region
    $region30: #{tpu_custom_call.1} parent=1 // pred_check
      _
    $region31: #{tpu_custom_call.1} parent=1 // pred_check_branch
      %75 = sbr.rel (0) target = $region33
    $region32: #{tpu_custom_call.1} parent=1 // pred_region
      %76 = dma.done [#allocation6], 32
    $region33: #{tpu_custom_call.1} parent=1 // pred_fallthru
      _
    // Predicated region
    $region34: #{tpu_custom_call.1} parent=1 // pred_check
      _
    $region35: #{tpu_custom_call.1} parent=1 // pred_check_branch
      %78 = sbr.rel (0) target = $region37
    $region36: #{tpu_custom_call.1} parent=1 // pred_region
      %79 = dma.done [#allocation6], 32
    $region37: #{tpu_custom_call.1} parent=1 // pred_fallthru
      _
    // Predicated region
    $region38: #{tpu_custom_call.1} parent=1 // pred_check
      _
    $region39: #{tpu_custom_call.1} parent=1 // pred_check_branch
      %81 = sbr.rel (0) target = $region41
    $region40: #{tpu_custom_call.1} parent=1 // pred_region
      %82 = dma.done [#allocation9], 3968
    $region41: #{tpu_custom_call.1} parent=1 // pred_fallthru
      _
    // Predicated region
    $region42: #{tpu_custom_call.1} parent=1 // pred_check
      _
    $region43: #{tpu_custom_call.1} parent=1 // pred_check_branch
      %84 = sbr.rel (0) target = $region45
    $region44: #{tpu_custom_call.1} parent=1 // pred_region
      %85 = dma.done [#allocation9], 1024
    $region45: #{tpu_custom_call.1} parent=1 // pred_fallthru
      _
    %v87 = vld [vmem:[#allocation2] sm:$0x3]
    %v88 = vld [vmem:[#allocation5] sm:$0x3]
    %v89 = vld [vmem:[#allocation7] sm:$0x3]
    %v90 = vpack.c.bf16 %v87, %v87
    %v91 = vpack.c.bf16 %v88, %v88
    %v92 = vld [vmem:[#allocation8] sm:$0xf]
    %v93 = vld [vmem:[#allocation8 + $0x4] sm:$0xf]
    %v94 = vld [vmem:[#allocation8 + $0x8] sm:$0xf]
    %v95 = vld [vmem:[#allocation8 + $0xc] sm:$0xf]
    %v96 = vld [vmem:[#allocation8 + $0x10] sm:$0xf]
    %v97 = vld [vmem:[#allocation8 + $0x14] sm:$0xf]
    %v98 = vld [vmem:[#allocation8 + $0x18] sm:$0xf]
    %v99 = vld [vmem:[#allocation8 + $0x1c] sm:$0xf]
    %v100 = vld [vmem:[#allocation8 + $0x20] sm:$0x3]
    %vm101 = vcmask 31744
    %v103 = vsel %vm101, %v91, 0
    %vm105 = vcmask 1041408
    %v107 = vsel %vm105, %v100, 0
    %109 = vmatprep.subr.bf16.mxu0 0
    %110 = vmatpush1.bf16.msra.mxu0 0
    %111 = vmatprep.subr.bf16.mxu0 0
    %112 = vmatpush1.bf16.msra.mxu0 0
    %113 = vmatprep.subr.bf16.mxu0 0
    %114 = vmatpush1.bf16.msra.mxu0 0
    %115 = vmatprep.subr.bf16.mxu0 0
    %116 = vmatpush1.bf16.msra.mxu0 0
    %117 = vmatprep.subr.bf16.mxu0 0
    %118 = vmatpush1.bf16.msra.mxu0 0
    %119 = vmatprep.subr.bf16.mxu0 0
    %120 = vmatpush1.bf16.msra.mxu0 0
    %121 = vmatprep.subr.bf16.mxu0 0
    %122 = vmatpush1.bf16.msra.mxu0 0
    %123 = vmatprep.subr.bf16.mxu0 0
    %124 = vmatpush1.bf16.msra.mxu0 %v107
    %125 = vmatprep.subr.bf16.mxu0 0
    %126 = vmatpush2.bf16.msra.mxu0 0
    %127 = vmatprep.subr.bf16.mxu0 0
    %128 = vmatpush2.bf16.msra.mxu0 0
    %129 = vmatprep.subr.bf16.mxu0 0
    %130 = vmatpush2.bf16.msra.mxu0 0
    %131 = vmatprep.subr.bf16.mxu0 0
    %132 = vmatpush2.bf16.msra.mxu0 0
    %133 = vmatprep.subr.bf16.mxu0 0
    %134 = vmatpush2.bf16.msra.mxu0 0
    %135 = vmatprep.subr.bf16.mxu0 0
    %136 = vmatpush2.bf16.msra.mxu0 0
    %137 = vmatprep.subr.bf16.mxu0 0
    %138 = vmatpush2.bf16.msra.mxu0 0
    %139 = vmatprep.subr.bf16.mxu0 0
    %140 = vmatpush2.bf16.msra.mxu0 0
    %141 = vmatprep.mubr.bf16.mxu0 0
    %142 = vmatmul.mubr.bf16.gmra.mxu0 %v103
    %v143 = vpop.f32.mrf.mxu0
    %v144 = vadd.f32 0.0, %v143
    %v145 = vpop.f32.mrf.mxu0
    %v146 = vpop.f32.mrf.mxu0
    %v147 = vpop.f32.mrf.mxu0
    %148 = vdwg.mxu0
    %v157 = vunpack.c.l.b16 %v92
    %v158 = vunpack.c.l.b16 %v93
    %v159 = vunpack.c.l.b16 %v94
    %v160 = vunpack.c.l.b16 %v95
    %v161 = vunpack.c.l.b16 %v96
    %v162 = vunpack.c.l.b16 %v97
    %v163 = vunpack.c.l.b16 %v98
    %v164 = vunpack.c.l.b16 %v99
    %v165 = vpack.c.b16 %v158, %v157
    %v166 = vpack.c.b16 %v160, %v159
    %v167 = vpack.c.b16 %v162, %v161
    %v168 = vpack.c.b16 %v164, %v163
    %vm173 = vcmask 523264
    %v175 = vsel %vm173, %v90, 0
    %177 = vmatprep.subr.bf16.mxu0 0
    %178 = vmatpush1.bf16.msra.mxu0 0
    %179 = vmatprep.subr.bf16.mxu0 0
    %180 = vmatpush1.bf16.msra.mxu0 0
    %181 = vmatprep.subr.bf16.mxu0 0
    %182 = vmatpush1.bf16.msra.mxu0 0
    %183 = vmatprep.subr.bf16.mxu0 0
    %184 = vmatpush1.bf16.msra.mxu0 0
    %185 = vmatprep.subr.bf16.mxu0 0
    %186 = vmatpush1.bf16.msra.mxu0 %v168
    %187 = vmatprep.subr.bf16.mxu0 0
    %188 = vmatpush1.bf16.msra.mxu0 %v167
    %189 = vmatprep.subr.bf16.mxu0 0
    %190 = vmatpush1.bf16.msra.mxu0 %v166
    %191 = vmatprep.subr.bf16.mxu0 0
    %192 = vmatpush1.bf16.msra.mxu0 %v165
    %193 = vmatprep.subr.bf16.mxu0 0
    %194 = vmatpush2.bf16.msra.mxu0 0
    %195 = vmatprep.subr.bf16.mxu0 0
    %196 = vmatpush2.bf16.msra.mxu0 0
    %197 = vmatprep.subr.bf16.mxu0 0
    %198 = vmatpush2.bf16.msra.mxu0 0
    %199 = vmatprep.subr.bf16.mxu0 0
    %200 = vmatpush2.bf16.msra.mxu0 0
    %201 = vmatprep.subr.bf16.mxu0 0
    %202 = vmatpush2.bf16.msra.mxu0 0
    %203 = vmatprep.subr.bf16.mxu0 0
    %204 = vmatpush2.bf16.msra.mxu0 0
    %205 = vmatprep.subr.bf16.mxu0 0
    %206 = vmatpush2.bf16.msra.mxu0 0
    %207 = vmatprep.subr.bf16.mxu0 0
    %208 = vmatpush2.bf16.msra.mxu0 0
    %209 = vmatprep.mubr.bf16.mxu0 0
    %210 = vmatmul.mubr.bf16.gmra.mxu0 %v175
    %v211 = vpop.f32.mrf.mxu0
    %v212 = vadd.f32 %v144, %v211
    %v213 = vpop.f32.mrf.mxu0
    %v214 = vpop.f32.mrf.mxu0
    %v215 = vpop.f32.mrf.mxu0
    %216 = vdwg.mxu0
    %v217 = vld [vmem:[%s5] sm:$0x1]
    %v218 = vlaneseq
    %v219 = vshrl.u32 %v218, 7
    %v220 = vsub.s32 0, %v219
    %v221 = vrot.slane %v217, %v220
    %v222 = vadd.f32 %v212, %v221
    %v223 = vmax.f32 %v222, 0.0
    %v224 = vpack.c.bf16 %v223, %v223
    %v225 = vld [vmem:[#allocation8 + $0x28] sm:$0xf]
    %v226 = vld [vmem:[#allocation8 + $0x2c] sm:$0xf]
    %v227 = vld [vmem:[#allocation8 + $0x30] sm:$0xf]
    %v228 = vld [vmem:[#allocation8 + $0x34] sm:$0xf]
    %v229 = vld [vmem:[#allocation8 + $0x38] sm:$0xf]
    %v230 = vld [vmem:[#allocation8 + $0x3c] sm:$0xf]
    %v231 = vld [vmem:[#allocation8 + $0x40] sm:$0xf]
    %v232 = vld [vmem:[#allocation8 + $0x44] sm:$0xf]
    %v233 = vld [vmem:[%s5 + $0x1] sm:$0x1]
    %v234 = vlaneseq
    %v235 = vshrl.u32 %v234, 7
    %v236 = vsub.s32 0, %v235
    %v237 = vrot.slane %v233, %v236
    %v246 = vunpack.c.l.b16 %v225
    %v247 = vunpack.c.l.b16 %v226
    %v248 = vunpack.c.l.b16 %v227
    %v249 = vunpack.c.l.b16 %v228
    %v250 = vunpack.c.l.b16 %v229
    %v251 = vunpack.c.l.b16 %v230
    %v252 = vunpack.c.l.b16 %v231
    %v253 = vunpack.c.l.b16 %v232
    %v254 = vpack.c.b16 %v247, %v246
    %v255 = vpack.c.b16 %v249, %v248
    %v256 = vpack.c.b16 %v251, %v250
    %v257 = vpack.c.b16 %v253, %v252
    %v263 = vsel %vm173, %v224, 0
    %265 = vmatprep.subr.bf16.mxu0 0
    %266 = vmatpush1.bf16.msra.mxu0 0
    %267 = vmatprep.subr.bf16.mxu0 0
    %268 = vmatpush1.bf16.msra.mxu0 0
    %269 = vmatprep.subr.bf16.mxu0 0
    %270 = vmatpush1.bf16.msra.mxu0 0
    %271 = vmatprep.subr.bf16.mxu0 0
    %272 = vmatpush1.bf16.msra.mxu0 0
    %273 = vmatprep.subr.bf16.mxu0 0
    %274 = vmatpush1.bf16.msra.mxu0 %v257
    %275 = vmatprep.subr.bf16.mxu0 0
    %276 = vmatpush1.bf16.msra.mxu0 %v256
    %277 = vmatprep.subr.bf16.mxu0 0
    %278 = vmatpush1.bf16.msra.mxu0 %v255
    %279 = vmatprep.subr.bf16.mxu0 0
    %280 = vmatpush1.bf16.msra.mxu0 %v254
    %281 = vmatprep.subr.bf16.mxu0 0
    %282 = vmatpush2.bf16.msra.mxu0 0
    %283 = vmatprep.subr.bf16.mxu0 0
    %284 = vmatpush2.bf16.msra.mxu0 0
    %285 = vmatprep.subr.bf16.mxu0 0
    %286 = vmatpush2.bf16.msra.mxu0 0
    %287 = vmatprep.subr.bf16.mxu0 0
    %288 = vmatpush2.bf16.msra.mxu0 0
    %289 = vmatprep.subr.bf16.mxu0 0
    %290 = vmatpush2.bf16.msra.mxu0 0
    %291 = vmatprep.subr.bf16.mxu0 0
    %292 = vmatpush2.bf16.msra.mxu0 0
    %293 = vmatprep.subr.bf16.mxu0 0
    %294 = vmatpush2.bf16.msra.mxu0 0
    %295 = vmatprep.subr.bf16.mxu0 0
    %296 = vmatpush2.bf16.msra.mxu0 0
    %297 = vmatprep.mubr.bf16.mxu0 0
    %298 = vmatmul.mubr.bf16.gmra.mxu0 %v263
    %v299 = vpop.f32.mrf.mxu0
    %v300 = vadd.f32 %v237, %v299
    %v301 = vpop.f32.mrf.mxu0
    %v302 = vpop.f32.mrf.mxu0
    %v303 = vpop.f32.mrf.mxu0
    %304 = vdwg.mxu0
    %v305 = vmax.f32 %v300, 0.0
    %v306 = vpack.c.bf16 %v305, %v305
    %v307 = vld [vmem:[#allocation8 + $0x48] sm:$0xf]
    %v308 = vld [vmem:[#allocation8 + $0x4c] sm:$0xf]
    %v309 = vld [vmem:[#allocation8 + $0x50] sm:$0xf]
    %v310 = vld [vmem:[#allocation8 + $0x54] sm:$0xf]
    %v311 = vld [vmem:[%s5 + $0x2] sm:$0x1]
    %v312 = vlaneseq
    %v313 = vshrl.u32 %v312, 7
    %v314 = vsub.s32 0, %v313
    %v315 = vrot.slane %v311, %v314
    %v320 = vunpack.c.l.b16 %v307
    %v321 = vunpack.c.l.b16 %v308
    %v322 = vunpack.c.l.b16 %v309
    %v323 = vunpack.c.l.b16 %v310
    %v324 = vpack.c.b16 %v321, %v320
    %v325 = vpack.c.b16 %v323, %v322
    %vm328 = vcmask 261120
    %v330 = vsel %vm328, %v306, 0
    %332 = vmatprep.subr.bf16.mxu0 0
    %333 = vmatpush1.bf16.msra.mxu0 0
    %334 = vmatprep.subr.bf16.mxu0 0
    %335 = vmatpush1.bf16.msra.mxu0 0
    %336 = vmatprep.subr.bf16.mxu0 0
    %337 = vmatpush1.bf16.msra.mxu0 0
    %338 = vmatprep.subr.bf16.mxu0 0
    %339 = vmatpush1.bf16.msra.mxu0 0
    %340 = vmatprep.subr.bf16.mxu0 0
    %341 = vmatpush1.bf16.msra.mxu0 0
    %342 = vmatprep.subr.bf16.mxu0 0
    %343 = vmatpush1.bf16.msra.mxu0 0
    %344 = vmatprep.subr.bf16.mxu0 0
    %345 = vmatpush1.bf16.msra.mxu0 %v325
    %346 = vmatprep.subr.bf16.mxu0 0
    %347 = vmatpush1.bf16.msra.mxu0 %v324
    %348 = vmatprep.subr.bf16.mxu0 0
    %349 = vmatpush2.bf16.msra.mxu0 0
    %350 = vmatprep.subr.bf16.mxu0 0
    %351 = vmatpush2.bf16.msra.mxu0 0
    %352 = vmatprep.subr.bf16.mxu0 0
    %353 = vmatpush2.bf16.msra.mxu0 0
    %354 = vmatprep.subr.bf16.mxu0 0
    %355 = vmatpush2.bf16.msra.mxu0 0
    %356 = vmatprep.subr.bf16.mxu0 0
    %357 = vmatpush2.bf16.msra.mxu0 0
    %358 = vmatprep.subr.bf16.mxu0 0
    %359 = vmatpush2.bf16.msra.mxu0 0
    %360 = vmatprep.subr.bf16.mxu0 0
    %361 = vmatpush2.bf16.msra.mxu0 0
    %362 = vmatprep.subr.bf16.mxu0 0
    %363 = vmatpush2.bf16.msra.mxu0 0
    %364 = vmatprep.mubr.bf16.mxu0 0
    %365 = vmatmul.mubr.bf16.gmra.mxu0 %v330
    %v366 = vpop.f32.mrf.mxu0
    %v367 = vadd.f32 %v315, %v366
    %v368 = vpop.f32.mrf.mxu0
    %v369 = vpop.f32.mrf.mxu0
    %v370 = vpop.f32.mrf.mxu0
    %371 = vdwg.mxu0
    %v372 = vld [vmem:[#allocation8 + $0x58] sm:$0xf]
    %v373 = vld [vmem:[#allocation8 + $0x5c] sm:$0xf]
    %v374 = vld [vmem:[#allocation8 + $0x60] sm:$0xf]
    %v375 = vld [vmem:[#allocation8 + $0x64] sm:$0xf]
    %v376 = vld [vmem:[%s5 + $0x3] sm:$0x1]
    %v377 = vlaneseq
    %v378 = vshrl.u32 %v377, 7
    %v379 = vsub.s32 0, %v378
    %v380 = vrot.slane %v376, %v379
    %v385 = vunpack.c.l.b16 %v372
    %v386 = vunpack.c.l.b16 %v373
    %v387 = vunpack.c.l.b16 %v374
    %v388 = vunpack.c.l.b16 %v375
    %v389 = vpack.c.b16 %v386, %v385
    %v390 = vpack.c.b16 %v388, %v387
    %393 = vmatprep.subr.bf16.mxu0 0
    %394 = vmatpush1.bf16.msra.mxu0 0
    %395 = vmatprep.subr.bf16.mxu0 0
    %396 = vmatpush1.bf16.msra.mxu0 0
    %397 = vmatprep.subr.bf16.mxu0 0
    %398 = vmatpush1.bf16.msra.mxu0 0
    %399 = vmatprep.subr.bf16.mxu0 0
    %400 = vmatpush1.bf16.msra.mxu0 0
    %401 = vmatprep.subr.bf16.mxu0 0
    %402 = vmatpush1.bf16.msra.mxu0 0
    %403 = vmatprep.subr.bf16.mxu0 0
    %404 = vmatpush1.bf16.msra.mxu0 0
    %405 = vmatprep.subr.bf16.mxu0 0
    %406 = vmatpush1.bf16.msra.mxu0 %v390
    %407 = vmatprep.subr.bf16.mxu0 0
    %408 = vmatpush1.bf16.msra.mxu0 %v389
    %409 = vmatprep.subr.bf16.mxu0 0
    %410 = vmatpush2.bf16.msra.mxu0 0
    %411 = vmatprep.subr.bf16.mxu0 0
    %412 = vmatpush2.bf16.msra.mxu0 0
    %413 = vmatprep.subr.bf16.mxu0 0
    %414 = vmatpush2.bf16.msra.mxu0 0
    %415 = vmatprep.subr.bf16.mxu0 0
    %416 = vmatpush2.bf16.msra.mxu0 0
    %417 = vmatprep.subr.bf16.mxu0 0
    %418 = vmatpush2.bf16.msra.mxu0 0
    %419 = vmatprep.subr.bf16.mxu0 0
    %420 = vmatpush2.bf16.msra.mxu0 0
    %421 = vmatprep.subr.bf16.mxu0 0
    %422 = vmatpush2.bf16.msra.mxu0 0
    %423 = vmatprep.subr.bf16.mxu0 0
    %424 = vmatpush2.bf16.msra.mxu0 0
    %425 = vmatprep.mubr.bf16.mxu0 0
    %426 = vmatmul.mubr.bf16.gmra.mxu0 %v330
    %v427 = vpop.f32.mrf.mxu0
    %v428 = vadd.f32 %v380, %v427
    %v429 = vpop.f32.mrf.mxu0
    %v430 = vpop.f32.mrf.mxu0
    %v431 = vpop.f32.mrf.mxu0
    %432 = vdwg.mxu0
    %v433 = vmul.f32 %v428, 0.5
    %v434 = vmul.f32 %v433, 1.442695
    %v435 = vpow.pop %v434
    %v436 = vmul.f32 %v89, %v435
    %v437 = vadd.f32 %v367, %v436
    %v438 = vmul.f32 %v89, -0.5
    %v439 = vmul.f32 %v438, %v89
    %v440 = vsub.f32 %v439, %v433
    %v441 = vsub.f32 %v440, 0.9189385
    %v442 = vpack.c.bf16 %v437, %v437
    %v443 = vld [vmem:[#allocation8 + $0x68] sm:$0xf]
    %v444 = vld [vmem:[#allocation8 + $0x70] sm:$0x3]
    %v446 = vsel %vm105, %v444, 0
    %448 = vmatprep.subr.bf16.mxu0 0
    %449 = vmatpush1.bf16.msra.mxu0 0
    %450 = vmatprep.subr.bf16.mxu0 0
    %451 = vmatpush1.bf16.msra.mxu0 0
    %452 = vmatprep.subr.bf16.mxu0 0
    %453 = vmatpush1.bf16.msra.mxu0 0
    %454 = vmatprep.subr.bf16.mxu0 0
    %455 = vmatpush1.bf16.msra.mxu0 0
    %456 = vmatprep.subr.bf16.mxu0 0
    %457 = vmatpush1.bf16.msra.mxu0 0
    %458 = vmatprep.subr.bf16.mxu0 0
    %459 = vmatpush1.bf16.msra.mxu0 0
    %460 = vmatprep.subr.bf16.mxu0 0
    %461 = vmatpush1.bf16.msra.mxu0 0
    %462 = vmatprep.subr.bf16.mxu0 0
    %463 = vmatpush1.bf16.msra.mxu0 %v446
    %464 = vmatprep.subr.bf16.mxu0 0
    %465 = vmatpush2.bf16.msra.mxu0 0
    %466 = vmatprep.subr.bf16.mxu0 0
    %467 = vmatpush2.bf16.msra.mxu0 0
    %468 = vmatprep.subr.bf16.mxu0 0
    %469 = vmatpush2.bf16.msra.mxu0 0
    %470 = vmatprep.subr.bf16.mxu0 0
    %471 = vmatpush2.bf16.msra.mxu0 0
    %472 = vmatprep.subr.bf16.mxu0 0
    %473 = vmatpush2.bf16.msra.mxu0 0
    %474 = vmatprep.subr.bf16.mxu0 0
    %475 = vmatpush2.bf16.msra.mxu0 0
    %476 = vmatprep.subr.bf16.mxu0 0
    %477 = vmatpush2.bf16.msra.mxu0 0
    %478 = vmatprep.subr.bf16.mxu0 0
    %479 = vmatpush2.bf16.msra.mxu0 0
    %480 = vmatprep.mubr.bf16.mxu0 0
    %481 = vmatmul.mubr.bf16.gmra.mxu0 %v103
    %v482 = vpop.f32.mrf.mxu0
    %v483 = vadd.f32 0.0, %v482
    %v484 = vpop.f32.mrf.mxu0
    %v485 = vpop.f32.mrf.mxu0
    %v486 = vpop.f32.mrf.mxu0
    %487 = vdwg.mxu0
    %vm488 = vcmask 64512
    %v490 = vsel %vm488, %v442, 0
    %vm492 = vcmask 1043456
    %v494 = vsel %vm492, %v443, 0
    %496 = vmatprep.subr.bf16.mxu0 0
    %497 = vmatpush1.bf16.msra.mxu0 0
    %498 = vmatprep.subr.bf16.mxu0 0
    %499 = vmatpush1.bf16.msra.mxu0 0
    %500 = vmatprep.subr.bf16.mxu0 0
    %501 = vmatpush1.bf16.msra.mxu0 0
    %502 = vmatprep.subr.bf16.mxu0 0
    %503 = vmatpush1.bf16.msra.mxu0 0
    %504 = vmatprep.subr.bf16.mxu0 0
    %505 = vmatpush1.bf16.msra.mxu0 0
    %506 = vmatprep.subr.bf16.mxu0 0
    %507 = vmatpush1.bf16.msra.mxu0 0
    %508 = vmatprep.subr.bf16.mxu0 0
    %509 = vmatpush1.bf16.msra.mxu0 0
    %510 = vmatprep.subr.bf16.mxu0 0
    %511 = vmatpush1.bf16.msra.mxu0 %v494
    %512 = vmatprep.subr.bf16.mxu0 0
    %513 = vmatpush2.bf16.msra.mxu0 0
    %514 = vmatprep.subr.bf16.mxu0 0
    %515 = vmatpush2.bf16.msra.mxu0 0
    %516 = vmatprep.subr.bf16.mxu0 0
    %517 = vmatpush2.bf16.msra.mxu0 0
    %518 = vmatprep.subr.bf16.mxu0 0
    %519 = vmatpush2.bf16.msra.mxu0 0
    %520 = vmatprep.subr.bf16.mxu0 0
    %521 = vmatpush2.bf16.msra.mxu0 0
    %522 = vmatprep.subr.bf16.mxu0 0
    %523 = vmatpush2.bf16.msra.mxu0 0
    %524 = vmatprep.subr.bf16.mxu0 0
    %525 = vmatpush2.bf16.msra.mxu0 0
    %526 = vmatprep.subr.bf16.mxu0 0
    %527 = vmatpush2.bf16.msra.mxu0 0
    %528 = vmatprep.mubr.bf16.mxu0 0
    %529 = vmatmul.mubr.bf16.gmra.mxu0 %v490
    %v530 = vpop.f32.mrf.mxu0
    %v531 = vadd.f32 %v483, %v530
    %v532 = vpop.f32.mrf.mxu0
    %v533 = vpop.f32.mrf.mxu0
    %v534 = vpop.f32.mrf.mxu0
    %535 = vdwg.mxu0
    %v536 = vld [vmem:[%s5 + $0x4] sm:$0x1]
    %v537 = vlaneseq
    %v538 = vshrl.u32 %v537, 7
    %v539 = vsub.s32 0, %v538
    %v540 = vrot.slane %v536, %v539
    %v541 = vadd.f32 %v531, %v540
    %v542 = vxor.u32 %v541, 2147483648
    %v543 = vmul.f32 %v542, 1.442695
    %v544 = vpow.pop %v543
    %v545 = vadd.f32 %v544, 1.0
    %v546 = vrcp.pop %v545
    %v547 = vmul.f32 1.0, %v546
    %v548 = vpack.c.bf16 %v547, %v547
    %v549 = vld [vmem:[#allocation8 + $0x78] sm:$0xf]
    %v550 = vld [vmem:[#allocation8 + $0x7c] sm:$0xf]
    %v551 = vld [vmem:[#allocation8 + $0x80] sm:$0xf]
    %v552 = vld [vmem:[%s5 + $0x5] sm:$0x1]
    %v553 = vlaneseq
    %v554 = vshrl.u32 %v553, 7
    %v555 = vsub.s32 0, %v554
    %v556 = vrot.slane %v552, %v555
    %v560 = vunpack.c.l.b16 %v549
    %v561 = vunpack.c.l.b16 %v550
    %v562 = vunpack.c.l.b16 %v551
    %v563 = vpack.c.b16 %v561, %v560
    %v564 = vpack.c.b16 %v562, %v562
    %vm566 = vcmask 195584
    %v568 = vsel %vm566, %v548, 0
    %v571 = vsel %vm492, %v564, 0
    %573 = vmatprep.subr.bf16.mxu0 0
    %574 = vmatpush1.bf16.msra.mxu0 0
    %575 = vmatprep.subr.bf16.mxu0 0
    %576 = vmatpush1.bf16.msra.mxu0 0
    %577 = vmatprep.subr.bf16.mxu0 0
    %578 = vmatpush1.bf16.msra.mxu0 0
    %579 = vmatprep.subr.bf16.mxu0 0
    %580 = vmatpush1.bf16.msra.mxu0 0
    %581 = vmatprep.subr.bf16.mxu0 0
    %582 = vmatpush1.bf16.msra.mxu0 0
    %583 = vmatprep.subr.bf16.mxu0 0
    %584 = vmatpush1.bf16.msra.mxu0 0
    %585 = vmatprep.subr.bf16.mxu0 0
    %586 = vmatpush1.bf16.msra.mxu0 %v571
    %587 = vmatprep.subr.bf16.mxu0 0
    %588 = vmatpush1.bf16.msra.mxu0 %v563
    %589 = vmatprep.subr.bf16.mxu0 0
    %590 = vmatpush2.bf16.msra.mxu0 0
    %591 = vmatprep.subr.bf16.mxu0 0
    %592 = vmatpush2.bf16.msra.mxu0 0
    %593 = vmatprep.subr.bf16.mxu0 0
    %594 = vmatpush2.bf16.msra.mxu0 0
    %595 = vmatprep.subr.bf16.mxu0 0
    %596 = vmatpush2.bf16.msra.mxu0 0
    %597 = vmatprep.subr.bf16.mxu0 0
    %598 = vmatpush2.bf16.msra.mxu0 0
    %599 = vmatprep.subr.bf16.mxu0 0
    %600 = vmatpush2.bf16.msra.mxu0 0
    %601 = vmatprep.subr.bf16.mxu0 0
    %602 = vmatpush2.bf16.msra.mxu0 0
    %603 = vmatprep.subr.bf16.mxu0 0
    %604 = vmatpush2.bf16.msra.mxu0 0
    %605 = vmatprep.mubr.bf16.mxu0 0
    %606 = vmatmul.mubr.bf16.gmra.mxu0 %v568
    %v607 = vpop.f32.mrf.mxu0
    %v608 = vadd.f32 %v556, %v607
    %v609 = vpop.f32.mrf.mxu0
    %v610 = vpop.f32.mrf.mxu0
    %v611 = vpop.f32.mrf.mxu0
    %612 = vdwg.mxu0
    %v613 = vxor.u32 %v608, 2147483648
    %v614 = vmul.f32 %v613, 1.442695
    %v615 = vpow.pop %v614
    %v616 = vadd.f32 %v615, 1.0
    %v617 = vrcp.pop %v616
    %v618 = vmul.f32 1.0, %v617
    %v619 = vpack.c.bf16 %v618, %v618
    %v620 = vld [vmem:[#allocation10] sm:$0xff]
    %v621 = vld [vmem:[#allocation10 + $0x8] sm:$0xff]
    %v622 = vld [vmem:[#allocation10 + $0x10] sm:$0xff]
    %v626 = vunpack.c.l.b16 %v620
    %v627 = vunpack.c.h.b16 %v620
    %v628 = vunpack.c.l.b16 %v621
    %v629 = vunpack.c.h.b16 %v621
    %v630 = vunpack.c.l.b16 %v622
    %v631 = vunpack.c.h.b16 %v622
    %v632 = vpack.c.b16 %v628, %v626
    %v633 = vpack.c.b16 %v629, %v627
    %v634 = vpack.c.b16 %v630, %v630
    %v635 = vpack.c.b16 %v631, %v631
    %v639 = vsel %vm566, %v619, 0
    %v642 = vsel %vm492, %v634, 0
    %v645 = vsel %vm492, %v635, 0
    %647 = vmatprep.subr.bf16.mxu0 0
    %648 = vmatpush1.bf16.msra.mxu0 0
    %649 = vmatprep.subr.bf16.mxu0 0
    %650 = vmatpush1.bf16.msra.mxu0 0
    %651 = vmatprep.subr.bf16.mxu0 0
    %652 = vmatpush1.bf16.msra.mxu0 0
    %653 = vmatprep.subr.bf16.mxu0 0
    %654 = vmatpush1.bf16.msra.mxu0 0
    %655 = vmatprep.subr.bf16.mxu0 0
    %656 = vmatpush1.bf16.msra.mxu0 0
    %657 = vmatprep.subr.bf16.mxu0 0
    %658 = vmatpush1.bf16.msra.mxu0 0
    %659 = vmatprep.subr.bf16.mxu0 %v645
    %660 = vmatpush1.bf16.msra.mxu0 %v642
    %661 = vmatprep.subr.bf16.mxu0 %v633
    %662 = vmatpush1.bf16.msra.mxu0 %v632
    %663 = vmatprep.subr.bf16.mxu0 0
    %664 = vmatpush2.bf16.msra.mxu0 0
    %665 = vmatprep.subr.bf16.mxu0 0
    %666 = vmatpush2.bf16.msra.mxu0 0
    %667 = vmatprep.subr.bf16.mxu0 0
    %668 = vmatpush2.bf16.msra.mxu0 0
    %669 = vmatprep.subr.bf16.mxu0 0
    %670 = vmatpush2.bf16.msra.mxu0 0
    %671 = vmatprep.subr.bf16.mxu0 0
    %672 = vmatpush2.bf16.msra.mxu0 0
    %673 = vmatprep.subr.bf16.mxu0 0
    %674 = vmatpush2.bf16.msra.mxu0 0
    %675 = vmatprep.subr.bf16.mxu0 0
    %676 = vmatpush2.bf16.msra.mxu0 0
    %677 = vmatprep.subr.bf16.mxu0 0
    %678 = vmatpush2.bf16.msra.mxu0 0
    %679 = vmatprep.mubr.bf16.mxu0 0
    %680 = vmatmul.mubr.bf16.gmra.mxu0 %v639
    %v681 = vpop.f32.mrf.mxu0
    %v682 = vadd.f32 0.0, %v681
    %v683 = vpop.f32.mrf.mxu0
    %v684 = vadd.f32 0.0, %v683
    %v685 = vpop.f32.mrf.mxu0
    %v686 = vpop.f32.mrf.mxu0
    %687 = vdwg.mxu0
    %v688 = vld [vmem:[#allocation10 + $0x20] sm:$0xff]
    %v689 = vld [vmem:[#allocation10 + $0x28] sm:$0xff]
    %v690 = vld [vmem:[#allocation10 + $0x30] sm:$0xff]
    %v694 = vunpack.c.l.b16 %v688
    %v695 = vunpack.c.h.b16 %v688
    %v696 = vunpack.c.l.b16 %v689
    %v697 = vunpack.c.h.b16 %v689
    %v698 = vunpack.c.l.b16 %v690
    %v699 = vunpack.c.h.b16 %v690
    %v700 = vpack.c.b16 %v696, %v694
    %v701 = vpack.c.b16 %v697, %v695
    %v702 = vpack.c.b16 %v698, %v698
    %v703 = vpack.c.b16 %v699, %v699
    %v707 = vsel %vm492, %v702, 0
    %v710 = vsel %vm492, %v703, 0
    %712 = vmatprep.subr.bf16.mxu0 0
    %713 = vmatpush1.bf16.msra.mxu0 0
    %714 = vmatprep.subr.bf16.mxu0 0
    %715 = vmatpush1.bf16.msra.mxu0 0
    %716 = vmatprep.subr.bf16.mxu0 0
    %717 = vmatpush1.bf16.msra.mxu0 0
    %718 = vmatprep.subr.bf16.mxu0 0
    %719 = vmatpush1.bf16.msra.mxu0 0
    %720 = vmatprep.subr.bf16.mxu0 0
    %721 = vmatpush1.bf16.msra.mxu0 0
    %722 = vmatprep.subr.bf16.mxu0 0
    %723 = vmatpush1.bf16.msra.mxu0 0
    %724 = vmatprep.subr.bf16.mxu0 %v710
    %725 = vmatpush1.bf16.msra.mxu0 %v707
    %726 = vmatprep.subr.bf16.mxu0 %v701
    %727 = vmatpush1.bf16.msra.mxu0 %v700
    %728 = vmatprep.subr.bf16.mxu0 0
    %729 = vmatpush2.bf16.msra.mxu0 0
    %730 = vmatprep.subr.bf16.mxu0 0
    %731 = vmatpush2.bf16.msra.mxu0 0
    %732 = vmatprep.subr.bf16.mxu0 0
    %733 = vmatpush2.bf16.msra.mxu0 0
    %734 = vmatprep.subr.bf16.mxu0 0
    %735 = vmatpush2.bf16.msra.mxu0 0
    %736 = vmatprep.subr.bf16.mxu0 0
    %737 = vmatpush2.bf16.msra.mxu0 0
    %738 = vmatprep.subr.bf16.mxu0 0
    %739 = vmatpush2.bf16.msra.mxu0 0
    %740 = vmatprep.subr.bf16.mxu0 0
    %741 = vmatpush2.bf16.msra.mxu0 0
    %742 = vmatprep.subr.bf16.mxu0 0
    %743 = vmatpush2.bf16.msra.mxu0 0
    %744 = vmatprep.mubr.bf16.mxu0 0
    %745 = vmatmul.mubr.bf16.gmra.mxu0 %v639
    %v746 = vpop.f32.mrf.mxu0
    %v747 = vadd.f32 0.0, %v746
    %v748 = vpop.f32.mrf.mxu0
    %v749 = vadd.f32 0.0, %v748
    %v750 = vpop.f32.mrf.mxu0
    %v751 = vpop.f32.mrf.mxu0
    %752 = vdwg.mxu0
    %v753 = vmul.f32 %v682, %v747
    %v754 = vmul.f32 %v684, %v749
    %v755 = vpack.c.bf16 %v753, %v753
    %v756 = vpack.c.bf16 %v754, %v754
    %v757 = vld [vmem:[#allocation8 + $0x88] sm:$0xf]
    %v758 = vld [vmem:[#allocation8 + $0x8c] sm:$0xf]
    %v759 = vld [vmem:[#allocation8 + $0x90] sm:$0xf]
    %v760 = vld [vmem:[#allocation8 + $0x94] sm:$0xf]
    %v761 = vld [vmem:[#allocation8 + $0x98] sm:$0xf]
    %v762 = vld [vmem:[#allocation8 + $0x9c] sm:$0xf]
    %v763 = vld [vmem:[#allocation8 + $0xa0] sm:$0xf]
    %v764 = vld [vmem:[#allocation8 + $0xa4] sm:$0xf]
    %v765 = vld [vmem:[#allocation8 + $0xa8] sm:$0xf]
    %v766 = vld [vmem:[#allocation8 + $0xac] sm:$0xf]
    %v767 = vld [vmem:[#allocation8 + $0xb0] sm:$0xf]
    %v768 = vld [vmem:[#allocation8 + $0xb4] sm:$0xf]
    %v769 = vld [vmem:[#allocation8 + $0xb8] sm:$0xf]
    %v770 = vld [vmem:[#allocation8 + $0xbc] sm:$0xf]
    %v771 = vld [vmem:[#allocation8 + $0xc0] sm:$0xf]
    %v772 = vld [vmem:[#allocation8 + $0xc4] sm:$0xf]
    %v773 = vld [vmem:[#allocation8 + $0xc8] sm:$0xf]
    %v774 = vld [vmem:[#allocation8 + $0xcc] sm:$0xf]
    %v775 = vld [vmem:[#allocation8 + $0xd0] sm:$0xf]
    %v776 = vld [vmem:[#allocation8 + $0xd4] sm:$0xf]
    %v777 = vld [vmem:[#allocation8 + $0xd8] sm:$0xf]
    %v778 = vld [vmem:[#allocation8 + $0xdc] sm:$0xf]
    %v779 = vld [vmem:[#allocation8 + $0xe0] sm:$0xf]
    %v780 = vld [vmem:[#allocation8 + $0xe4] sm:$0xf]
    %v781 = vld [vmem:[%s5 + $0x6] sm:$0x1]
    %v782 = vlaneseq
    %v783 = vshrl.u32 %v782, 7
    %v784 = vsub.s32 0, %v783
    %v785 = vrot.slane %v781, %v784
    %v810 = vunpack.c.l.b16 %v757
    %v811 = vunpack.c.l.b16 %v758
    %v812 = vunpack.c.l.b16 %v759
    %v813 = vunpack.c.l.b16 %v760
    %v814 = vunpack.c.l.b16 %v761
    %v815 = vunpack.c.l.b16 %v762
    %v816 = vunpack.c.l.b16 %v763
    %v817 = vunpack.c.l.b16 %v764
    %v818 = vunpack.c.l.b16 %v765
    %v819 = vunpack.c.l.b16 %v766
    %v820 = vunpack.c.l.b16 %v767
    %v821 = vunpack.c.l.b16 %v768
    %v822 = vunpack.c.l.b16 %v769
    %v823 = vunpack.c.l.b16 %v770
    %v824 = vunpack.c.l.b16 %v771
    %v825 = vunpack.c.l.b16 %v772
    %v826 = vunpack.c.l.b16 %v773
    %v827 = vunpack.c.l.b16 %v774
    %v828 = vunpack.c.l.b16 %v775
    %v829 = vunpack.c.l.b16 %v776
    %v830 = vunpack.c.l.b16 %v777
    %v831 = vunpack.c.l.b16 %v778
    %v832 = vunpack.c.l.b16 %v779
    %v833 = vunpack.c.l.b16 %v780
    %v834 = vpack.c.b16 %v811, %v810
    %v835 = vpack.c.b16 %v813, %v812
    %v836 = vpack.c.b16 %v815, %v814
    %v837 = vpack.c.b16 %v817, %v816
    %v838 = vpack.c.b16 %v819, %v818
    %v839 = vpack.c.b16 %v821, %v820
    %v840 = vpack.c.b16 %v823, %v822
    %v841 = vpack.c.b16 %v825, %v824
    %v842 = vpack.c.b16 %v827, %v826
    %v843 = vpack.c.b16 %v829, %v828
    %v844 = vpack.c.b16 %v831, %v830
    %v845 = vpack.c.b16 %v833, %v832
    %v859 = vsel %vm173, %v756, 0
    %861 = vmatprep.subr.bf16.mxu0 0
    %862 = vmatpush1.bf16.msra.mxu0 %v841
    %863 = vmatprep.subr.bf16.mxu0 0
    %864 = vmatpush1.bf16.msra.mxu0 %v840
    %865 = vmatprep.subr.bf16.mxu0 0
    %866 = vmatpush1.bf16.msra.mxu0 %v839
    %867 = vmatprep.subr.bf16.mxu0 0
    %868 = vmatpush1.bf16.msra.mxu0 %v838
    %869 = vmatprep.subr.bf16.mxu0 0
    %870 = vmatpush1.bf16.msra.mxu0 %v837
    %871 = vmatprep.subr.bf16.mxu0 0
    %872 = vmatpush1.bf16.msra.mxu0 %v836
    %873 = vmatprep.subr.bf16.mxu0 0
    %874 = vmatpush1.bf16.msra.mxu0 %v835
    %875 = vmatprep.subr.bf16.mxu0 0
    %876 = vmatpush1.bf16.msra.mxu0 %v834
    %877 = vmatprep.subr.bf16.mxu0 0
    %878 = vmatpush2.bf16.msra.mxu0 0
    %879 = vmatprep.subr.bf16.mxu0 0
    %880 = vmatpush2.bf16.msra.mxu0 0
    %881 = vmatprep.subr.bf16.mxu0 0
    %882 = vmatpush2.bf16.msra.mxu0 0
    %883 = vmatprep.subr.bf16.mxu0 0
    %884 = vmatpush2.bf16.msra.mxu0 0
    %885 = vmatprep.subr.bf16.mxu0 0
    %886 = vmatpush2.bf16.msra.mxu0 %v845
    %887 = vmatprep.subr.bf16.mxu0 0
    %888 = vmatpush2.bf16.msra.mxu0 %v844
    %889 = vmatprep.subr.bf16.mxu0 0
    %890 = vmatpush2.bf16.msra.mxu0 %v843
    %891 = vmatprep.subr.bf16.mxu0 0
    %892 = vmatpush2.bf16.msra.mxu0 %v842
    %893 = vmatprep.mubr.bf16.mxu0 %v859
    %894 = vmatmul.mubr.bf16.gmra.mxu0 %v755
    %v895 = vpop.f32.mrf.mxu0
    %v896 = vadd.f32 %v785, %v895
    %v897 = vpop.f32.mrf.mxu0
    %v898 = vpop.f32.mrf.mxu0
    %v899 = vpop.f32.mrf.mxu0
    %900 = vdwg.mxu0
    %v901 = vmul.f32 %v896, 1.442695
    %v902 = vpow.pop %v901
    %v903 = vld [vmem:[#allocation8 + $0xe8] sm:$0xf]
    %v904 = vld [vmem:[#allocation8 + $0xf0] sm:$0x3]
    %v906 = vsel %vm105, %v904, 0
    %908 = vmatprep.subr.bf16.mxu0 0
    %909 = vmatpush1.bf16.msra.mxu0 0
    %910 = vmatprep.subr.bf16.mxu0 0
    %911 = vmatpush1.bf16.msra.mxu0 0
    %912 = vmatprep.subr.bf16.mxu0 0
    %913 = vmatpush1.bf16.msra.mxu0 0
    %914 = vmatprep.subr.bf16.mxu0 0
    %915 = vmatpush1.bf16.msra.mxu0 0
    %916 = vmatprep.subr.bf16.mxu0 0
    %917 = vmatpush1.bf16.msra.mxu0 0
    %918 = vmatprep.subr.bf16.mxu0 0
    %919 = vmatpush1.bf16.msra.mxu0 0
    %920 = vmatprep.subr.bf16.mxu0 0
    %921 = vmatpush1.bf16.msra.mxu0 0
    %922 = vmatprep.subr.bf16.mxu0 0
    %923 = vmatpush1.bf16.msra.mxu0 %v906
    %924 = vmatprep.subr.bf16.mxu0 0
    %925 = vmatpush2.bf16.msra.mxu0 0
    %926 = vmatprep.subr.bf16.mxu0 0
    %927 = vmatpush2.bf16.msra.mxu0 0
    %928 = vmatprep.subr.bf16.mxu0 0
    %929 = vmatpush2.bf16.msra.mxu0 0
    %930 = vmatprep.subr.bf16.mxu0 0
    %931 = vmatpush2.bf16.msra.mxu0 0
    %932 = vmatprep.subr.bf16.mxu0 0
    %933 = vmatpush2.bf16.msra.mxu0 0
    %934 = vmatprep.subr.bf16.mxu0 0
    %935 = vmatpush2.bf16.msra.mxu0 0
    %936 = vmatprep.subr.bf16.mxu0 0
    %937 = vmatpush2.bf16.msra.mxu0 0
    %938 = vmatprep.subr.bf16.mxu0 0
    %939 = vmatpush2.bf16.msra.mxu0 0
    %940 = vmatprep.mubr.bf16.mxu0 0
    %941 = vmatmul.mubr.bf16.gmra.mxu0 %v103
    %v942 = vpop.f32.mrf.mxu0
    %v943 = vadd.f32 0.0, %v942
    %v944 = vpop.f32.mrf.mxu0
    %v945 = vpop.f32.mrf.mxu0
    %v946 = vpop.f32.mrf.mxu0
    %947 = vdwg.mxu0
    %v949 = vsel %vm492, %v903, 0
    %951 = vmatprep.subr.bf16.mxu0 0
    %952 = vmatpush1.bf16.msra.mxu0 0
    %953 = vmatprep.subr.bf16.mxu0 0
    %954 = vmatpush1.bf16.msra.mxu0 0
    %955 = vmatprep.subr.bf16.mxu0 0
    %956 = vmatpush1.bf16.msra.mxu0 0
    %957 = vmatprep.subr.bf16.mxu0 0
    %958 = vmatpush1.bf16.msra.mxu0 0
    %959 = vmatprep.subr.bf16.mxu0 0
    %960 = vmatpush1.bf16.msra.mxu0 0
    %961 = vmatprep.subr.bf16.mxu0 0
    %962 = vmatpush1.bf16.msra.mxu0 0
    %963 = vmatprep.subr.bf16.mxu0 0
    %964 = vmatpush1.bf16.msra.mxu0 0
    %965 = vmatprep.subr.bf16.mxu0 0
    %966 = vmatpush1.bf16.msra.mxu0 %v949
    %967 = vmatprep.subr.bf16.mxu0 0
    %968 = vmatpush2.bf16.msra.mxu0 0
    %969 = vmatprep.subr.bf16.mxu0 0
    %970 = vmatpush2.bf16.msra.mxu0 0
    %971 = vmatprep.subr.bf16.mxu0 0
    %972 = vmatpush2.bf16.msra.mxu0 0
    %973 = vmatprep.subr.bf16.mxu0 0
    %974 = vmatpush2.bf16.msra.mxu0 0
    %975 = vmatprep.subr.bf16.mxu0 0
    %976 = vmatpush2.bf16.msra.mxu0 0
    %977 = vmatprep.subr.bf16.mxu0 0
    %978 = vmatpush2.bf16.msra.mxu0 0
    %979 = vmatprep.subr.bf16.mxu0 0
    %980 = vmatpush2.bf16.msra.mxu0 0
    %981 = vmatprep.subr.bf16.mxu0 0
    %982 = vmatpush2.bf16.msra.mxu0 0
    %983 = vmatprep.mubr.bf16.mxu0 0
    %984 = vmatmul.mubr.bf16.gmra.mxu0 %v490
    %v985 = vpop.f32.mrf.mxu0
    %v986 = vadd.f32 %v943, %v985
    %v987 = vpop.f32.mrf.mxu0
    %v988 = vpop.f32.mrf.mxu0
    %v989 = vpop.f32.mrf.mxu0
    %990 = vdwg.mxu0
    %v991 = vld [vmem:[%s5 + $0x7] sm:$0x1]
    %v992 = vlaneseq
    %v993 = vshrl.u32 %v992, 7
    %v994 = vsub.s32 0, %v993
    %v995 = vrot.slane %v991, %v994
    %v996 = vadd.f32 %v986, %v995
    %vm997 = vcmask 517120
    %998 = vst.msk [vmem:[#allocation11] sm:$0x3] %vm997, %v902
    %1000 = vrot.lane.b32.xlu0 %v437, 64
    %v1001 = vpop.permute.xlu0 %1000
    %vm1003 = vcmask 583168
    %1004 = vst.msk [vmem:[#allocation11] sm:$0x3] %vm1003, %v1001
    %1006 = vrot.lane.b32.xlu0 %v441, 72
    %v1007 = vpop.permute.xlu0 %1006
    %vm1009 = vcmask 648768
    %1010 = vst.msk [vmem:[#allocation11] sm:$0x3] %vm1009, %v1007
    %1012 = vrot.lane.b32.xlu0 %v996, 80
    %v1013 = vpop.permute.xlu0 %1012
    %vm1015 = vcmask 665216
    %1016 = vst.msk [vmem:[#allocation11] sm:$0x3] %vm1015, %v1013
    %vm1017 = vcmask 1042064
    %1018 = vst.msk [vmem:[#allocation11] sm:$0x3] %vm1017, 0.0
    // Predicated region
    $region46: #{tpu_custom_call.1} parent=1 // pred_check
      _
    $region47: #{tpu_custom_call.1} parent=1 // pred_check_branch
      %1020 = sbr.rel (0) target = $region49
    $region48: #{tpu_custom_call.1} parent=1 // pred_region
      %s1022 = ssub.s32 32, 32
      %1023 = vsyncadd [#allocation4], %s1022
      %s1025 = sshll.u32 [#allocation11], 4
      %s1026 = int_to_ptr.vmem [resolvable:$true] %s1025
      %1028 = dma.vmem_to_hbm [thread:$0]  %s1026, 32, %s6, [#allocation4]
    $region49: #{tpu_custom_call.1} parent=1 // pred_fallthru
      _
    // Predicated region
    $region50: #{tpu_custom_call.1} parent=1 // pred_check
      _
    $region51: #{tpu_custom_call.1} parent=1 // pred_check_branch
      %1030 = sbr.rel (0) target = $region53
    $region52: #{tpu_custom_call.1} parent=1 // pred_region
      %1031 = dma.done [#allocation4], 32
    $region53: #{tpu_custom_call.1} parent=1 // pred_fallthru
      _
    %1032 = vsyncpa [#allocation3], 1
    %1033 = vsyncpa [#allocation6], 1
    %1034 = vsyncpa [#allocation9], 1
    %1035 = vsyncpa [#allocation4], 1

</llo_original>
